<compile_context>
chip_gen: v7x
topology: tpu7x:2x2x1
jax: 0.10.0
libtpu: 0.0.40
codegen_flags: <defaults>
</compile_context>

<pallas_src>
import jax
import jax.numpy as jnp
from jax.experimental import pallas as pl
from jax.experimental.pallas import tpu as pltpu

IN_FEATURES = 512


def _round_up(x, m):
    return ((x + m - 1) // m) * m


def dueling_kernel(x_ref, w_ref, b_ref, q_ref):
    # x: (TM, 512)        w: (512, A) bf16 folded weights (resident in VMEM)
    # b: (1, A)  f32      q: (TM, A)
    x = x_ref[...]
    if x.dtype != jnp.bfloat16:
        x = x.astype(jnp.bfloat16)
    # Single MXU matmul, f32 accumulation; epilogue is just the bias add.
    q = jnp.dot(x, w_ref[...], preferred_element_type=jnp.float32) + b_ref[...]
    q_ref[...] = q.astype(q_ref.dtype)


def dueling_forward(x, w_a, b_a, w_v, b_v, *, block_m=1024, out_dtype=None):
    """x: (B, 512); w_a: (512, A); b_a: (A,); w_v: (512, 1); b_v: (1,)."""
    B, D = x.shape
    A = w_a.shape[1]
    assert D == IN_FEATURES
    out_dtype = x.dtype if out_dtype is None else out_dtype

    # ---- Fold the dueling epilogue into the weights (one-time, few-KiB op) ----
    #   q = (x@W_A + b_a) + (x@w_v + b_v) - mean(x@W_A + b_a, axis=1)
    #     = x @ (W_A + (w_v - mean_cols(W_A)))  +  (b_a + b_v - mean(b_a))
    w_a32 = w_a.astype(jnp.float32)
    b_a32 = b_a.astype(jnp.float32)
    w_q = w_a32 + (w_v.astype(jnp.float32) - jnp.mean(w_a32, axis=1, keepdims=True))
    b_q = (b_a32 + (b_v.astype(jnp.float32) - jnp.mean(b_a32))).reshape(1, A)
    w_q = w_q.astype(jnp.bfloat16)          # halve resident weight footprint/DMA
    b_q = b_q.astype(jnp.float32)

    # ---- Batch tiling ----
    itemsize = jnp.dtype(x.dtype).itemsize
    tm = min(block_m, _round_up(B, 8))
    tm = max(8, (tm // 8) * 8)

    # v5e scoped-VMEM default is 16 MiB: keep double-buffered x tiles (plus a
    # little for out/weights) comfortably inside it.
    max_tm = max(8, ((12 << 20) // (2 * D * itemsize) // 8) * 8)
    tm = min(tm, max_tm)

    # v7x megacore: if one tile would cover the whole batch but the batch is
    # large enough, split into >=2 tiles of >=512 rows so the "parallel" axis
    # can shard across both TensorCores.
    if B >= 1024 and pl.cdiv(B, tm) < 2:
        tm = max(512, _round_up(pl.cdiv(B, 2), 8))

    grid_m = pl.cdiv(B, tm)

    return pl.pallas_call(
        dueling_kernel,
        out_shape=jax.ShapeDtypeStruct((B, A), out_dtype),
        grid=(grid_m,),
        in_specs=[
            pl.BlockSpec((tm, D), lambda i: (i, 0)),   # x: tiled along batch
            pl.BlockSpec((D, A), lambda i: (0, 0)),    # folded weights: resident
            pl.BlockSpec((1, A), lambda i: (0, 0)),    # folded bias: resident
        ],
        out_specs=pl.BlockSpec((tm, A), lambda i: (i, 0)),
        compiler_params=pltpu.CompilerParams(
            dimension_semantics=("parallel",),
        ),
    )(x, w_q, b_q)


def reference_forward(x, w_a, b_a, w_v, b_v):
    a = x @ w_a + b_a
    v = x @ w_v + b_v
    return v + a - a.mean(axis=1, keepdims=True)


if __name__ == "__main__":
    key = jax.random.PRNGKey(0)
    k_x, k_wa, k_ba, k_wv, k_bv = jax.random.split(key, 5)

    B = 2            # batch
    n_actions = 6    # small action space

    # Deterministic synthetic params (PyTorch-Linear-like uniform scale).
    bound = 1.0 / jnp.sqrt(IN_FEATURES)
    x = jax.random.normal(k_x, (B, IN_FEATURES), dtype=jnp.float32)
    w_a = jax.random.uniform(k_wa, (IN_FEATURES, n_actions), jnp.float32, -bound, bound)
    b_a = jax.random.uniform(k_ba, (n_actions,), jnp.float32, -bound, bound)
    w_v = jax.random.uniform(k_wv, (IN_FEATURES, 1), jnp.float32, -bound, bound)
    b_v = jax.random.uniform(k_bv, (1,), jnp.float32, -bound, bound)

    q = dueling_forward(x, w_a, b_a, w_v, b_v)
    q = jax.block_until_ready(q)

    q_ref = reference_forward(x, w_a, b_a, w_v, b_v)
    assert q.shape == (B, n_actions)
    assert q.dtype == jnp.float32
    # Tolerance relaxed vs pure-f32 because MXU operands are bf16 (f32 accum).
    assert jnp.allclose(q, q_ref, atol=2e-2, rtol=2e-2), "mismatch vs reference"

    print("KERNEL_OK")
</pallas_src>

<mosaic_0001>
module attributes {stable_mosaic.version = 11 : i64} {
  func.func @dueling_kernel(%arg0: i32, %arg1: memref<8x512xf32, #tpu.memory_space<vmem>>, %arg2: memref<512x6xbf16, #tpu.memory_space<vmem>>, %arg3: memref<1x6xf32, #tpu.memory_space<vmem>>, %arg4: memref<8x6xf32, #tpu.memory_space<vmem>>) attributes {dimension_semantics = [#tpu.dimension_semantics<parallel>], iteration_bounds = array<i64: 1>, scalar_prefetch = 0 : i64, scratch_operands = 0 : i64, tpu.core_type = #tpu.core_type<tc>, window_params = [{transform_indices = @transform_0, window_bounds = array<i64: 8, 512>}, {pipeline_mode = #tpu.pipeline_mode<synchronous>, transform_indices = @transform_1, window_bounds = array<i64: 512, 6>}, {pipeline_mode = #tpu.pipeline_mode<synchronous>, transform_indices = @transform_2, window_bounds = array<i64: 1, 6>}, {transform_indices = @transform_3, window_bounds = array<i64: 8, 6>}]} {
    %c0 = arith.constant 0 : index
    %c0_0 = arith.constant 0 : index
    %0 = vector.load %arg1[%c0, %c0_0] : memref<8x512xf32, #tpu.memory_space<vmem>>, vector<8x512xf32>
    %1 = arith.truncf %0 : vector<8x512xf32> to vector<8x512xbf16>
    %c0_1 = arith.constant 0 : index
    %c0_2 = arith.constant 0 : index
    %2 = vector.load %arg2[%c0_1, %c0_2] : memref<512x6xbf16, #tpu.memory_space<vmem>>, vector<512x6xbf16>
    %cst = arith.constant dense<0.000000e+00> : vector<8x6xf32>
    %3 = tpu.matmul %1, %2, %cst {dimension_numbers = #tpu.dot_dimension_numbers<[1], [0], [0], [1], [0, 0, 1, 1], [], []>} : vector<8x512xbf16>, vector<512x6xbf16>, vector<8x6xf32> -> vector<8x6xf32>
    %c0_3 = arith.constant 0 : index
    %c0_4 = arith.constant 0 : index
    %4 = vector.load %arg3[%c0_3, %c0_4] : memref<1x6xf32, #tpu.memory_space<vmem>>, vector<1x6xf32>
    %5 = vector.broadcast %4 : vector<1x6xf32> to vector<8x6xf32>
    %6 = arith.addf %3, %5 : vector<8x6xf32>
    %c0_5 = arith.constant 0 : index
    %c0_6 = arith.constant 0 : index
    %7 = vector.load %arg4[%c0_5, %c0_6] : memref<8x6xf32, #tpu.memory_space<vmem>>, vector<8x6xf32>
    tpu.vector_store %arg4[%c0_5, %c0_6], %6 {strides = array<i32>} : memref<8x6xf32, #tpu.memory_space<vmem>>, vector<8x6xf32>,
    return
  }
  func.func @transform_0(%arg0: i32) -> (i32, i32) {
    %c0_i32 = arith.constant 0 : i32
    %c0_i32_0 = arith.constant 0 : i32
    return %arg0, %c0_i32 : i32, i32
  }
  func.func @transform_1(%arg0: i32) -> (i32, i32) {
    %c0_i32 = arith.constant 0 : i32
    %c0_i32_0 = arith.constant 0 : i32
    %c0_i32_1 = arith.constant 0 : i32
    return %c0_i32, %c0_i32_0 : i32, i32
  }
  func.func @transform_2(%arg0: i32) -> (i32, i32) {
    %c0_i32 = arith.constant 0 : i32
    %c0_i32_0 = arith.constant 0 : i32
    %c0_i32_1 = arith.constant 0 : i32
    return %c0_i32, %c0_i32_0 : i32, i32
  }
  func.func @transform_3(%arg0: i32) -> (i32, i32) {
    %c0_i32 = arith.constant 0 : i32
    %c0_i32_0 = arith.constant 0 : i32
    return %arg0, %c0_i32 : i32, i32
  }
}

</mosaic_0001>

<llo_original>
// kernel: tpu_custom_call.1
$region0: #{tpu_custom_call.1}
  #allocation0 [shape = 'u32[]', space=smem, size = 0x4, offset = 0x4, fixed_abs, tag = 'smem constant byte address 0x4 - core index']
  #allocation1 [shape = 'u32[144,128]{1,0:T(1,128)}', space=vmem, size = 0x12000, scoped, tag = 'internal scratch']
  %s0 = inlined_call_operand.vmem [shape: f32[2,512], index: 0, kind: input, shape index: {}]
  %s1 = inlined_call_operand.vmem [shape: bf16[512,6], index: 1, kind: input, shape index: {}]
  %s2 = inlined_call_operand.vmem [shape: f32[1,6], index: 2, kind: input, shape index: {}]
  %s3 = inlined_call_operand.hbm [shape: f32[2,6], index: 3, kind: output, shape index: {}]
  %s4 = sld [smem:[#allocation0]]
  $region22: #{tpu_custom_call.1} parent=0
    _
  %s6 = ssub.s32 1, %s4
  %s7 = scalar_select 0, %s6, %s4
  $region1: #{tpu_custom_call.1} parent=0
    #allocation2 [shape = 'u8[4096]{0}', space=vmem, size = 0x1000, scoped, tag = 'output window, operand 0, single buffered']
    #allocation3 [shape = 's32[1]{0}', space=sflag, size = 0x4, scoped, tag = 'scoped memory for tpu_custom_call.1']
    %8 = vsyncpa [#allocation3], 0
    // Predicated region
    $region2: #{tpu_custom_call.1} parent=1 // pred_check
      _
    $region3: #{tpu_custom_call.1} parent=1 // pred_check_branch
      %10 = sbr.rel (0) target = $region5
    $region4: #{tpu_custom_call.1} parent=1 // pred_region
      _
    $region5: #{tpu_custom_call.1} parent=1 // pred_fallthru
      _
    // Predicated region
    $region6: #{tpu_custom_call.1} parent=1 // pred_check
      _
    $region7: #{tpu_custom_call.1} parent=1 // pred_check_branch
      %12 = sbr.rel (0) target = $region9
    $region8: #{tpu_custom_call.1} parent=1 // pred_region
      _
    $region9: #{tpu_custom_call.1} parent=1 // pred_fallthru
      _
    // Predicated region
    $region10: #{tpu_custom_call.1} parent=1 // pred_check
      _
    $region11: #{tpu_custom_call.1} parent=1 // pred_check_branch
      %14 = sbr.rel (0) target = $region13
    $region12: #{tpu_custom_call.1} parent=1 // pred_region
      _
    $region13: #{tpu_custom_call.1} parent=1 // pred_fallthru
      _
    %v16 = vld [vmem:[%s0] sm:$0xff]
    %v17 = vld [vmem:[%s0 + $0x8] sm:$0xff]
    %v18 = vld [vmem:[%s0 + $0x10] sm:$0xff]
    %v19 = vld [vmem:[%s0 + $0x18] sm:$0xff]
    %v24 = vcombine.low %v16, %v17
    %v25 = vcombine.high %v16, %v17
    %v26 = vcombine.low %v18, %v19
    %v27 = vcombine.high %v18, %v19
    %v29 = vunpack.c.l.s4 1983009808
    %v30 = vunpack.c.0.s8 %v29
    %v31 = vlaneseq
    %v32 = vshrl.u32 %v31, 7
    %v33 = vsub.s32 %v30, %v32
    %v34 = vrot.slane %v24, %v33
    %v36 = vunpack.c.l.s4 1983009808
    %v37 = vunpack.c.0.s8 %v36
    %v38 = vlaneseq
    %v39 = vshrl.u32 %v38, 7
    %v40 = vsub.s32 %v37, %v39
    %v41 = vrot.slane %v25, %v40
    %v43 = vunpack.c.l.s4 1983009808
    %v44 = vunpack.c.0.s8 %v43
    %v45 = vlaneseq
    %v46 = vshrl.u32 %v45, 7
    %v47 = vsub.s32 %v44, %v46
    %v48 = vrot.slane %v26, %v47
    %v50 = vunpack.c.l.s4 1983009808
    %v51 = vunpack.c.0.s8 %v50
    %v52 = vlaneseq
    %v53 = vshrl.u32 %v52, 7
    %v54 = vsub.s32 %v51, %v53
    %v55 = vrot.slane %v27, %v54
    %v56 = vcombine.low %v34, %v48
    %v57 = vcombine.high %v34, %v48
    %v58 = vcombine.low %v41, %v55
    %v59 = vcombine.high %v41, %v55
    %v64 = vpack.c.bf16 %v56, %v56
    %v65 = vpack.c.bf16 %v57, %v57
    %v66 = vpack.c.bf16 %v58, %v58
    %v67 = vpack.c.bf16 %v59, %v59
    %v68 = vld [vmem:[%s1] sm:$0xf]
    %v69 = vld [vmem:[%s1 + $0x4] sm:$0xf]
    %v70 = vld [vmem:[%s1 + $0x8] sm:$0xf]
    %v71 = vld [vmem:[%s1 + $0xc] sm:$0xf]
    %v72 = vld [vmem:[%s1 + $0x10] sm:$0xf]
    %v73 = vld [vmem:[%s1 + $0x14] sm:$0xf]
    %v74 = vld [vmem:[%s1 + $0x18] sm:$0xf]
    %v75 = vld [vmem:[%s1 + $0x1c] sm:$0xf]
    %v76 = vld [vmem:[%s1 + $0x20] sm:$0xf]
    %v77 = vld [vmem:[%s1 + $0x24] sm:$0xf]
    %v78 = vld [vmem:[%s1 + $0x28] sm:$0xf]
    %v79 = vld [vmem:[%s1 + $0x2c] sm:$0xf]
    %v80 = vld [vmem:[%s1 + $0x30] sm:$0xf]
    %v81 = vld [vmem:[%s1 + $0x34] sm:$0xf]
    %v82 = vld [vmem:[%s1 + $0x38] sm:$0xf]
    %v83 = vld [vmem:[%s1 + $0x3c] sm:$0xf]
    %v84 = vld [vmem:[%s1 + $0x40] sm:$0xf]
    %v85 = vld [vmem:[%s1 + $0x44] sm:$0xf]
    %v86 = vld [vmem:[%s1 + $0x48] sm:$0xf]
    %v87 = vld [vmem:[%s1 + $0x4c] sm:$0xf]
    %v88 = vld [vmem:[%s1 + $0x50] sm:$0xf]
    %v89 = vld [vmem:[%s1 + $0x54] sm:$0xf]
    %v90 = vld [vmem:[%s1 + $0x58] sm:$0xf]
    %v91 = vld [vmem:[%s1 + $0x5c] sm:$0xf]
    %v92 = vld [vmem:[%s1 + $0x60] sm:$0xf]
    %v93 = vld [vmem:[%s1 + $0x64] sm:$0xf]
    %v94 = vld [vmem:[%s1 + $0x68] sm:$0xf]
    %v95 = vld [vmem:[%s1 + $0x6c] sm:$0xf]
    %v96 = vld [vmem:[%s1 + $0x70] sm:$0xf]
    %v97 = vld [vmem:[%s1 + $0x74] sm:$0xf]
    %v98 = vld [vmem:[%s1 + $0x78] sm:$0xf]
    %v99 = vld [vmem:[%s1 + $0x7c] sm:$0xf]
    %v100 = vld [vmem:[%s1 + $0x80] sm:$0xf]
    %v101 = vld [vmem:[%s1 + $0x84] sm:$0xf]
    %v102 = vld [vmem:[%s1 + $0x88] sm:$0xf]
    %v103 = vld [vmem:[%s1 + $0x8c] sm:$0xf]
    %v104 = vld [vmem:[%s1 + $0x90] sm:$0xf]
    %v105 = vld [vmem:[%s1 + $0x94] sm:$0xf]
    %v106 = vld [vmem:[%s1 + $0x98] sm:$0xf]
    %v107 = vld [vmem:[%s1 + $0x9c] sm:$0xf]
    %v108 = vld [vmem:[%s1 + $0xa0] sm:$0xf]
    %v109 = vld [vmem:[%s1 + $0xa4] sm:$0xf]
    %v110 = vld [vmem:[%s1 + $0xa8] sm:$0xf]
    %v111 = vld [vmem:[%s1 + $0xac] sm:$0xf]
    %v112 = vld [vmem:[%s1 + $0xb0] sm:$0xf]
    %v113 = vld [vmem:[%s1 + $0xb4] sm:$0xf]
    %v114 = vld [vmem:[%s1 + $0xb8] sm:$0xf]
    %v115 = vld [vmem:[%s1 + $0xbc] sm:$0xf]
    %v116 = vld [vmem:[%s1 + $0xc0] sm:$0xf]
    %v117 = vld [vmem:[%s1 + $0xc4] sm:$0xf]
    %v118 = vld [vmem:[%s1 + $0xc8] sm:$0xf]
    %v119 = vld [vmem:[%s1 + $0xcc] sm:$0xf]
    %v120 = vld [vmem:[%s1 + $0xd0] sm:$0xf]
    %v121 = vld [vmem:[%s1 + $0xd4] sm:$0xf]
    %v122 = vld [vmem:[%s1 + $0xd8] sm:$0xf]
    %v123 = vld [vmem:[%s1 + $0xdc] sm:$0xf]
    %v124 = vld [vmem:[%s1 + $0xe0] sm:$0xf]
    %v125 = vld [vmem:[%s1 + $0xe4] sm:$0xf]
    %v126 = vld [vmem:[%s1 + $0xe8] sm:$0xf]
    %v127 = vld [vmem:[%s1 + $0xec] sm:$0xf]
    %v128 = vld [vmem:[%s1 + $0xf0] sm:$0xf]
    %v129 = vld [vmem:[%s1 + $0xf4] sm:$0xf]
    %v130 = vld [vmem:[%s1 + $0xf8] sm:$0xf]
    %v131 = vld [vmem:[%s1 + $0xfc] sm:$0xf]
    %v132 = vld [vmem:[%s2] sm:$0x1]
    %v134 = vlaneseq
    %v135 = vshrl.u32 %v134, 7
    %v136 = vsub.s32 0, %v135
    %v137 = vrot.slane %v132, %v136
    %v203 = vunpack.c.l.b16 %v68
    %v204 = vunpack.c.l.b16 %v69
    %v205 = vunpack.c.l.b16 %v70
    %v206 = vunpack.c.l.b16 %v71
    %v207 = vunpack.c.l.b16 %v72
    %v208 = vunpack.c.l.b16 %v73
    %v209 = vunpack.c.l.b16 %v74
    %v210 = vunpack.c.l.b16 %v75
    %v211 = vunpack.c.l.b16 %v76
    %v212 = vunpack.c.l.b16 %v77
    %v213 = vunpack.c.l.b16 %v78
    %v214 = vunpack.c.l.b16 %v79
    %v215 = vunpack.c.l.b16 %v80
    %v216 = vunpack.c.l.b16 %v81
    %v217 = vunpack.c.l.b16 %v82
    %v218 = vunpack.c.l.b16 %v83
    %v219 = vunpack.c.l.b16 %v84
    %v220 = vunpack.c.l.b16 %v85
    %v221 = vunpack.c.l.b16 %v86
    %v222 = vunpack.c.l.b16 %v87
    %v223 = vunpack.c.l.b16 %v88
    %v224 = vunpack.c.l.b16 %v89
    %v225 = vunpack.c.l.b16 %v90
    %v226 = vunpack.c.l.b16 %v91
    %v227 = vunpack.c.l.b16 %v92
    %v228 = vunpack.c.l.b16 %v93
    %v229 = vunpack.c.l.b16 %v94
    %v230 = vunpack.c.l.b16 %v95
    %v231 = vunpack.c.l.b16 %v96
    %v232 = vunpack.c.l.b16 %v97
    %v233 = vunpack.c.l.b16 %v98
    %v234 = vunpack.c.l.b16 %v99
    %v235 = vunpack.c.l.b16 %v100
    %v236 = vunpack.c.l.b16 %v101
    %v237 = vunpack.c.l.b16 %v102
    %v238 = vunpack.c.l.b16 %v103
    %v239 = vunpack.c.l.b16 %v104
    %v240 = vunpack.c.l.b16 %v105
    %v241 = vunpack.c.l.b16 %v106
    %v242 = vunpack.c.l.b16 %v107
    %v243 = vunpack.c.l.b16 %v108
    %v244 = vunpack.c.l.b16 %v109
    %v245 = vunpack.c.l.b16 %v110
    %v246 = vunpack.c.l.b16 %v111
    %v247 = vunpack.c.l.b16 %v112
    %v248 = vunpack.c.l.b16 %v113
    %v249 = vunpack.c.l.b16 %v114
    %v250 = vunpack.c.l.b16 %v115
    %v251 = vunpack.c.l.b16 %v116
    %v252 = vunpack.c.l.b16 %v117
    %v253 = vunpack.c.l.b16 %v118
    %v254 = vunpack.c.l.b16 %v119
    %v255 = vunpack.c.l.b16 %v120
    %v256 = vunpack.c.l.b16 %v121
    %v257 = vunpack.c.l.b16 %v122
    %v258 = vunpack.c.l.b16 %v123
    %v259 = vunpack.c.l.b16 %v124
    %v260 = vunpack.c.l.b16 %v125
    %v261 = vunpack.c.l.b16 %v126
    %v262 = vunpack.c.l.b16 %v127
    %v263 = vunpack.c.l.b16 %v128
    %v264 = vunpack.c.l.b16 %v129
    %v265 = vunpack.c.l.b16 %v130
    %v266 = vunpack.c.l.b16 %v131
    %v267 = vpack.c.b16 %v204, %v203
    %v268 = vpack.c.b16 %v206, %v205
    %v269 = vpack.c.b16 %v208, %v207
    %v270 = vpack.c.b16 %v210, %v209
    %v271 = vpack.c.b16 %v212, %v211
    %v272 = vpack.c.b16 %v214, %v213
    %v273 = vpack.c.b16 %v216, %v215
    %v274 = vpack.c.b16 %v218, %v217
    %v275 = vpack.c.b16 %v220, %v219
    %v276 = vpack.c.b16 %v222, %v221
    %v277 = vpack.c.b16 %v224, %v223
    %v278 = vpack.c.b16 %v226, %v225
    %v279 = vpack.c.b16 %v228, %v227
    %v280 = vpack.c.b16 %v230, %v229
    %v281 = vpack.c.b16 %v232, %v231
    %v282 = vpack.c.b16 %v234, %v233
    %v283 = vpack.c.b16 %v236, %v235
    %v284 = vpack.c.b16 %v238, %v237
    %v285 = vpack.c.b16 %v240, %v239
    %v286 = vpack.c.b16 %v242, %v241
    %v287 = vpack.c.b16 %v244, %v243
    %v288 = vpack.c.b16 %v246, %v245
    %v289 = vpack.c.b16 %v248, %v247
    %v290 = vpack.c.b16 %v250, %v249
    %v291 = vpack.c.b16 %v252, %v251
    %v292 = vpack.c.b16 %v254, %v253
    %v293 = vpack.c.b16 %v256, %v255
    %v294 = vpack.c.b16 %v258, %v257
    %v295 = vpack.c.b16 %v260, %v259
    %v296 = vpack.c.b16 %v262, %v261
    %v297 = vpack.c.b16 %v264, %v263
    %v298 = vpack.c.b16 %v266, %v265
    %331 = vmatprep.subr.bf16.mxu0 0
    %332 = vmatpush1.bf16.msra.mxu0 %v267
    %333 = vmatprep.subr.bf16.mxu0 0
    %334 = vmatpush1.bf16.msra.mxu0 %v268
    %335 = vmatprep.subr.bf16.mxu0 0
    %336 = vmatpush1.bf16.msra.mxu0 %v269
    %337 = vmatprep.subr.bf16.mxu0 0
    %338 = vmatpush1.bf16.msra.mxu0 %v270
    %339 = vmatprep.subr.bf16.mxu0 0
    %340 = vmatpush1.bf16.msra.mxu0 %v271
    %341 = vmatprep.subr.bf16.mxu0 0
    %342 = vmatpush1.bf16.msra.mxu0 %v272
    %343 = vmatprep.subr.bf16.mxu0 0
    %344 = vmatpush1.bf16.msra.mxu0 %v273
    %345 = vmatprep.subr.bf16.mxu0 0
    %346 = vmatpush1.bf16.msra.mxu0 %v274
    %347 = vmatprep.subr.bf16.mxu0 0
    %348 = vmatpush1.bf16.msra.mxu0 %v275
    %349 = vmatprep.subr.bf16.mxu0 0
    %350 = vmatpush1.bf16.msra.mxu0 %v276
    %351 = vmatprep.subr.bf16.mxu0 0
    %352 = vmatpush1.bf16.msra.mxu0 %v277
    %353 = vmatprep.subr.bf16.mxu0 0
    %354 = vmatpush1.bf16.msra.mxu0 %v278
    %355 = vmatprep.subr.bf16.mxu0 0
    %356 = vmatpush1.bf16.msra.mxu0 %v279
    %357 = vmatprep.subr.bf16.mxu0 0
    %358 = vmatpush1.bf16.msra.mxu0 %v280
    %359 = vmatprep.subr.bf16.mxu0 0
    %360 = vmatpush1.bf16.msra.mxu0 %v281
    %361 = vmatprep.subr.bf16.mxu0 0
    %362 = vmatpush1.bf16.msra.mxu0 %v282
    %363 = vmatprep.mubr.bf16.mxu0 %v65
    %364 = vmatmul.mubr.bf16.gmra.mrb[0].mxu0 %v64
    %v365 = vpop.f32.mrb[0].mxu0
    %v366 = vadd.f32 %v137, %v365
    %v367 = vpop.f32.mrb[0].mxu0
    %v368 = vpop.f32.mrb[0].mxu0
    %v369 = vpop.f32.mrb[0].mxu0
    %370 = vdwg.mxu0
    %371 = vmatprep.subr.bf16.mxu0 0
    %372 = vmatpush1.bf16.msra.mxu0 %v283
    %373 = vmatprep.subr.bf16.mxu0 0
    %374 = vmatpush1.bf16.msra.mxu0 %v284
    %375 = vmatprep.subr.bf16.mxu0 0
    %376 = vmatpush1.bf16.msra.mxu0 %v285
    %377 = vmatprep.subr.bf16.mxu0 0
    %378 = vmatpush1.bf16.msra.mxu0 %v286
    %379 = vmatprep.subr.bf16.mxu0 0
    %380 = vmatpush1.bf16.msra.mxu0 %v287
    %381 = vmatprep.subr.bf16.mxu0 0
    %382 = vmatpush1.bf16.msra.mxu0 %v288
    %383 = vmatprep.subr.bf16.mxu0 0
    %384 = vmatpush1.bf16.msra.mxu0 %v289
    %385 = vmatprep.subr.bf16.mxu0 0
    %386 = vmatpush1.bf16.msra.mxu0 %v290
    %387 = vmatprep.subr.bf16.mxu0 0
    %388 = vmatpush1.bf16.msra.mxu0 %v291
    %389 = vmatprep.subr.bf16.mxu0 0
    %390 = vmatpush1.bf16.msra.mxu0 %v292
    %391 = vmatprep.subr.bf16.mxu0 0
    %392 = vmatpush1.bf16.msra.mxu0 %v293
    %393 = vmatprep.subr.bf16.mxu0 0
    %394 = vmatpush1.bf16.msra.mxu0 %v294
    %395 = vmatprep.subr.bf16.mxu0 0
    %396 = vmatpush1.bf16.msra.mxu0 %v295
    %397 = vmatprep.subr.bf16.mxu0 0
    %398 = vmatpush1.bf16.msra.mxu0 %v296
    %399 = vmatprep.subr.bf16.mxu0 0
    %400 = vmatpush1.bf16.msra.mxu0 %v297
    %401 = vmatprep.subr.bf16.mxu0 0
    %402 = vmatpush1.bf16.msra.mxu0 %v298
    %403 = vmatprep.mubr.bf16.mxu0 %v67
    %404 = vmatmul.mubr.bf16.gmra.mrb[0].mxu0 %v66
    %v405 = vpop.f32.mrb[0].mxu0
    %v406 = vadd.f32 %v366, %v405
    %v407 = vpop.f32.mrb[0].mxu0
    %v408 = vpop.f32.mrb[0].mxu0
    %v409 = vpop.f32.mrb[0].mxu0
    %410 = vdwg.mxu0
    %vm411 = vcmask 48128
    %412 = vst.msk [vmem:[#allocation2] sm:$0xff] %vm411, %v406
    // Predicated region
    $region14: #{tpu_custom_call.1} parent=1 // pred_check
      _
    $region15: #{tpu_custom_call.1} parent=1 // pred_check_branch
      %414 = sbr.rel (0) target = $region17
    $region16: #{tpu_custom_call.1} parent=1 // pred_region
      %s416 = ssub.s32 128, 32
      %417 = vsyncadd [#allocation3], %s416
      %s418 = sshll.u32 [#allocation2], 4
      %s419 = int_to_ptr.vmem [resolvable:$true] %s418
      %424 = dma.vmem_to_hbm [thread:$0]  %s419, 32, %s3, [#allocation3], 32, 32, 2
    $region17: #{tpu_custom_call.1} parent=1 // pred_fallthru
      _
    // Predicated region
    $region18: #{tpu_custom_call.1} parent=1 // pred_check
      _
    $region19: #{tpu_custom_call.1} parent=1 // pred_check_branch
      %426 = sbr.rel (0) target = $region21
    $region20: #{tpu_custom_call.1} parent=1 // pred_region
      %427 = dma.done [#allocation3], 128
    $region21: #{tpu_custom_call.1} parent=1 // pred_fallthru
      _
    %428 = vsyncpa [#allocation3], 1

</llo_original>
